<compile_context>
chip_gen: v5e
topology: v5e:2x2
jax: 0.10.0
libtpu: 0.0.40
codegen_flags: <defaults>
</compile_context>

<pallas_src>
import numpy as np
import jax
import jax.numpy as jnp
from jax.experimental import pallas as pl
from jax.experimental.pallas import tpu as pltpu


# ---------------------------------------------------------------------------
# Host-side construction of the Gaussian band matrices (static per scale).
# ---------------------------------------------------------------------------
def _gaussian_1d(scale):
    sigma = (1.0 / scale - 1.0) / 2.0
    ksize = 2 * round(sigma * 4) + 1          # always odd -> ka == kb
    ka = ksize // 2
    ax = np.arange(ksize, dtype=np.float64)
    mean = (ksize - 1) / 2.0
    g = np.exp(-((ax - mean) ** 2) / (2.0 * sigma ** 2))
    g = g / g.sum()
    return g.astype(np.float32), ka


def _band_matrix(n_in, stride, g, ka):
    """M[i_in, i_out] so that (zeropad(x) conv g)[::stride] == x @ M along that axis."""
    n_out = -(-n_in // stride)                # ceil(n_in / stride)
    K = g.shape[0]
    m = np.zeros((n_in, n_out), dtype=np.float32)
    for o in range(n_out):
        base = o * stride - ka
        for k in range(K):
            i = base + k
            if 0 <= i < n_in:                 # out-of-range taps hit the zero padding
                m[i, o] += g[k]
    return m


# ---------------------------------------------------------------------------
# Fused Pallas kernel: one block of planes per grid step, all scales at once.
# ---------------------------------------------------------------------------
def _make_pyramid_kernel(n_scales):
    def kernel(x_ref, *refs):
        band_refs = refs[:2 * n_scales]
        out_refs = refs[2 * n_scales:]
        x = x_ref[...].astype(jnp.float32)            # (Pb, H, W), resident once
        pb, h, w = x.shape
        xm = x.reshape(pb * h, w)                     # big-M for the first matmul
        for s in range(n_scales):
            mw = band_refs[2 * s][...]                # (W, Wd_s)
            mht = band_refs[2 * s + 1][...]           # (Hd_s, H)
            wd = mw.shape[1]
            y = jnp.dot(xm, mw, preferred_element_type=jnp.float32)   # (Pb*H, Wd)
            y3 = y.reshape(pb, h, wd)
            o_ref = out_refs[s]
            for p in range(pb):                       # per-plane vertical reduce
                o = jnp.dot(mht, y3[p], preferred_element_type=jnp.float32)
                o_ref[p] = o.astype(o_ref.dtype)      # cast in-kernel (native dtype out)
    return kernel


def _pick_plane_block(n_planes, h, w, itemsize, scale_hw,
                      vmem_budget_bytes=16 * 1024 * 1024):
    """Largest divisor of n_planes fitting a conservative VMEM budget,
    preferring an even grid length (v7x has 2 TensorCores)."""
    per_plane = 2 * h * w * itemsize        # double-buffered input block
    per_plane += 2 * h * w * 4              # f32 working copy / slack
    for (hd, wd) in scale_hw:
        per_plane += h * wd * 4             # first-stage intermediate
        per_plane += 2 * hd * wd * itemsize  # double-buffered output block
    cap = max(1, vmem_budget_bytes // max(per_plane, 1))
    divisors = [d for d in range(1, n_planes + 1)
                if n_planes % d == 0 and d <= cap]
    even = [d for d in divisors if (n_planes // d) % 2 == 0]
    return max(even) if even else max(divisors)


def image_pyramide(x, scales):
    """Pallas equivalent of ImagePyramide(scales, num_channels)(x)."""
    out_dict = {}
    B, C, H, W = x.shape

    down_scales = [s for s in scales if s != 1.0]
    for s in scales:
        if s == 1.0:
            out_dict['prediction_' + str(s)] = x      # identity passthrough

    if not down_scales:
        return out_dict

    # Host-side band matrices (tiny, static per scale).
    mats = []
    scale_hw = []
    for s in down_scales:
        g, ka = _gaussian_1d(s)
        stride = int(1.0 / s)
        mw = _band_matrix(W, stride, g, ka)                     # (W, Wd)
        mht = np.ascontiguousarray(_band_matrix(H, stride, g, ka).T)  # (Hd, H)
        mats.append((jnp.asarray(mw), jnp.asarray(mht)))
        scale_hw.append((mht.shape[0], mw.shape[1]))

    P = B * C
    x_flat = x.reshape(P, H, W)                                 # view, no extra HBM pass
    pb = _pick_plane_block(P, H, W, x.dtype.itemsize, scale_hw)
    grid = (P // pb,)

    in_specs = [pl.BlockSpec((pb, H, W), lambda p: (p, 0, 0))]
    operands = [x_flat]
    for (mw, mht), (hd, wd) in zip(mats, scale_hw):
        in_specs.append(pl.BlockSpec((W, wd), lambda p: (0, 0)))
        in_specs.append(pl.BlockSpec((hd, H), lambda p: (0, 0)))
        operands.extend([mw, mht])

    out_shape = [jax.ShapeDtypeStruct((P, hd, wd), x.dtype) for (hd, wd) in scale_hw]
    out_specs = [pl.BlockSpec((pb, hd, wd), lambda p: (p, 0, 0))
                 for (hd, wd) in scale_hw]

    outs = pl.pallas_call(
        _make_pyramid_kernel(len(down_scales)),
        out_shape=out_shape,
        grid=grid,
        in_specs=in_specs,
        out_specs=out_specs,
        compiler_params=pltpu.CompilerParams(
            dimension_semantics=("parallel",)),
    )(*operands)

    for s, o, (hd, wd) in zip(down_scales, outs, scale_hw):
        out_dict['prediction_' + str(s)] = o.reshape(B, C, hd, wd)
    return out_dict


# ---------------------------------------------------------------------------
# Pure-JAX/XLA reference (independent path: pad + depthwise conv + stride).
# ---------------------------------------------------------------------------
def anti_alias_downsample_reference(x, scale):
    if scale == 1.0:
        return x
    B, C, H, W = x.shape
    sigma = (1.0 / scale - 1.0) / 2.0
    K = 2 * round(sigma * 4) + 1
    ka = K // 2
    kb = ka
    ax = np.arange(K, dtype=np.float64)
    mean = (K - 1) / 2.0
    g1 = np.exp(-((ax - mean) ** 2) / (2.0 * sigma ** 2))
    k2 = np.outer(g1, g1)
    k2 = (k2 / k2.sum()).astype(np.float32)
    w = jnp.asarray(np.tile(k2[None, None], (C, 1, 1, 1)))      # (C, 1, K, K)
    xp = jnp.pad(x, ((0, 0), (0, 0), (ka, kb), (ka, kb)))
    y = jax.lax.conv_general_dilated(
        xp, w, window_strides=(1, 1), padding='VALID',
        dimension_numbers=('NCHW', 'OIHW', 'NCHW'),
        feature_group_count=C)
    s = int(1.0 / scale)
    return y[:, :, ::s, ::s]


if __name__ == "__main__":
    # Small shapes consistent with the module's forward (image batch, 4 channels).
    B, C, H, W = 2, 4, 16, 16
    scales = (1.0, 0.5, 0.25, 0.125)

    key = jax.random.PRNGKey(0)
    x = jax.random.normal(key, (B, C, H, W), dtype=jnp.float32)

    outs = image_pyramide(x, scales)
    jax.block_until_ready(outs)

    for scale in scales:
        got = outs['prediction_' + str(scale)]
        ref = anti_alias_downsample_reference(x, scale)
        assert got.shape == ref.shape, (scale, got.shape, ref.shape)
        assert jnp.allclose(got, ref, atol=1e-4, rtol=1e-4), f"mismatch at scale {scale}"

    print("KERNEL_OK")
</pallas_src>

<mosaic_0001>
module attributes {stable_mosaic.version = 11 : i64} {
  func.func @kernel(%arg0: i32, %arg1: memref<4x16x16xf32, #tpu.memory_space<vmem>>, %arg2: memref<16x8xf32, #tpu.memory_space<vmem>>, %arg3: memref<8x16xf32, #tpu.memory_space<vmem>>, %arg4: memref<16x4xf32, #tpu.memory_space<vmem>>, %arg5: memref<4x16xf32, #tpu.memory_space<vmem>>, %arg6: memref<16x2xf32, #tpu.memory_space<vmem>>, %arg7: memref<2x16xf32, #tpu.memory_space<vmem>>, %arg8: memref<4x8x8xf32, #tpu.memory_space<vmem>>, %arg9: memref<4x4x4xf32, #tpu.memory_space<vmem>>, %arg10: memref<4x2x2xf32, #tpu.memory_space<vmem>>) attributes {dimension_semantics = [#tpu.dimension_semantics<parallel>], iteration_bounds = array<i64: 2>, scalar_prefetch = 0 : i64, scratch_operands = 0 : i64, tpu.core_type = #tpu.core_type<tc>, window_params = [{transform_indices = @transform_0, window_bounds = array<i64: 4, 16, 16>}, {pipeline_mode = #tpu.pipeline_mode<synchronous>, transform_indices = @transform_1, window_bounds = array<i64: 16, 8>}, {pipeline_mode = #tpu.pipeline_mode<synchronous>, transform_indices = @transform_2, window_bounds = array<i64: 8, 16>}, {pipeline_mode = #tpu.pipeline_mode<synchronous>, transform_indices = @transform_3, window_bounds = array<i64: 16, 4>}, {pipeline_mode = #tpu.pipeline_mode<synchronous>, transform_indices = @transform_4, window_bounds = array<i64: 4, 16>}, {pipeline_mode = #tpu.pipeline_mode<synchronous>, transform_indices = @transform_5, window_bounds = array<i64: 16, 2>}, {pipeline_mode = #tpu.pipeline_mode<synchronous>, transform_indices = @transform_6, window_bounds = array<i64: 2, 16>}, {transform_indices = @transform_7, window_bounds = array<i64: 4, 8, 8>}, {transform_indices = @transform_8, window_bounds = array<i64: 4, 4, 4>}, {transform_indices = @transform_9, window_bounds = array<i64: 4, 2, 2>}]} {
    %c0 = arith.constant 0 : index
    %c0_0 = arith.constant 0 : index
    %c0_1 = arith.constant 0 : index
    %0 = vector.load %arg1[%c0, %c0_0, %c0_1] : memref<4x16x16xf32, #tpu.memory_space<vmem>>, vector<4x16x16xf32>
    %1 = vector.shape_cast %0 : vector<4x16x16xf32> to vector<64x16xf32>
    %c0_2 = arith.constant 0 : index
    %c0_3 = arith.constant 0 : index
    %2 = vector.load %arg2[%c0_2, %c0_3] : memref<16x8xf32, #tpu.memory_space<vmem>>, vector<16x8xf32>
    %c0_4 = arith.constant 0 : index
    %c0_5 = arith.constant 0 : index
    %3 = vector.load %arg3[%c0_4, %c0_5] : memref<8x16xf32, #tpu.memory_space<vmem>>, vector<8x16xf32>
    %cst = arith.constant dense<0.000000e+00> : vector<64x8xf32>
    %4 = tpu.matmul %1, %2, %cst {dimension_numbers = #tpu.dot_dimension_numbers<[1], [0], [0], [1], [0, 0, 1, 1], [], []>} : vector<64x16xf32>, vector<16x8xf32>, vector<64x8xf32> -> vector<64x8xf32>
    %5 = vector.shape_cast %4 : vector<64x8xf32> to vector<4x16x8xf32>
    %6 = vector.extract_strided_slice %5 {offsets = [0, 0, 0], sizes = [1, 16, 8], strides = [1, 1, 1]} : vector<4x16x8xf32> to vector<1x16x8xf32>
    %7 = vector.shape_cast %6 : vector<1x16x8xf32> to vector<16x8xf32>
    %cst_6 = arith.constant dense<0.000000e+00> : vector<8x8xf32>
    %8 = tpu.matmul %3, %7, %cst_6 {dimension_numbers = #tpu.dot_dimension_numbers<[1], [0], [0], [1], [0, 0, 1, 1], [], []>} : vector<8x16xf32>, vector<16x8xf32>, vector<8x8xf32> -> vector<8x8xf32>
    %c0_7 = arith.constant 0 : index
    %c0_8 = arith.constant 0 : index
    %c0_9 = arith.constant 0 : index
    %9 = vector.load %arg8[%c0_7, %c0_8, %c0_9] : memref<4x8x8xf32, #tpu.memory_space<vmem>>, vector<1x8x8xf32>
    %10 = vector.shape_cast %9 : vector<1x8x8xf32> to vector<8x8xf32>
    %11 = vector.shape_cast %8 : vector<8x8xf32> to vector<1x8x8xf32>
    tpu.vector_store %arg8[%c0_7, %c0_8, %c0_9], %11 {strides = array<i32>} : memref<4x8x8xf32, #tpu.memory_space<vmem>>, vector<1x8x8xf32>,
    %12 = vector.extract_strided_slice %5 {offsets = [1, 0, 0], sizes = [1, 16, 8], strides = [1, 1, 1]} : vector<4x16x8xf32> to vector<1x16x8xf32>
    %13 = vector.shape_cast %12 : vector<1x16x8xf32> to vector<16x8xf32>
    %cst_10 = arith.constant dense<0.000000e+00> : vector<8x8xf32>
    %14 = tpu.matmul %3, %13, %cst_10 {dimension_numbers = #tpu.dot_dimension_numbers<[1], [0], [0], [1], [0, 0, 1, 1], [], []>} : vector<8x16xf32>, vector<16x8xf32>, vector<8x8xf32> -> vector<8x8xf32>
    %c1 = arith.constant 1 : index
    %c0_11 = arith.constant 0 : index
    %c0_12 = arith.constant 0 : index
    %15 = vector.load %arg8[%c1, %c0_11, %c0_12] : memref<4x8x8xf32, #tpu.memory_space<vmem>>, vector<1x8x8xf32>
    %16 = vector.shape_cast %15 : vector<1x8x8xf32> to vector<8x8xf32>
    %17 = vector.shape_cast %14 : vector<8x8xf32> to vector<1x8x8xf32>
    tpu.vector_store %arg8[%c1, %c0_11, %c0_12], %17 {strides = array<i32>} : memref<4x8x8xf32, #tpu.memory_space<vmem>>, vector<1x8x8xf32>,
    %18 = vector.extract_strided_slice %5 {offsets = [2, 0, 0], sizes = [1, 16, 8], strides = [1, 1, 1]} : vector<4x16x8xf32> to vector<1x16x8xf32>
    %19 = vector.shape_cast %18 : vector<1x16x8xf32> to vector<16x8xf32>
    %cst_13 = arith.constant dense<0.000000e+00> : vector<8x8xf32>
    %20 = tpu.matmul %3, %19, %cst_13 {dimension_numbers = #tpu.dot_dimension_numbers<[1], [0], [0], [1], [0, 0, 1, 1], [], []>} : vector<8x16xf32>, vector<16x8xf32>, vector<8x8xf32> -> vector<8x8xf32>
    %c2 = arith.constant 2 : index
    %c0_14 = arith.constant 0 : index
    %c0_15 = arith.constant 0 : index
    %21 = vector.load %arg8[%c2, %c0_14, %c0_15] : memref<4x8x8xf32, #tpu.memory_space<vmem>>, vector<1x8x8xf32>
    %22 = vector.shape_cast %21 : vector<1x8x8xf32> to vector<8x8xf32>
    %23 = vector.shape_cast %20 : vector<8x8xf32> to vector<1x8x8xf32>
    tpu.vector_store %arg8[%c2, %c0_14, %c0_15], %23 {strides = array<i32>} : memref<4x8x8xf32, #tpu.memory_space<vmem>>, vector<1x8x8xf32>,
    %24 = vector.extract_strided_slice %5 {offsets = [3, 0, 0], sizes = [1, 16, 8], strides = [1, 1, 1]} : vector<4x16x8xf32> to vector<1x16x8xf32>
    %25 = vector.shape_cast %24 : vector<1x16x8xf32> to vector<16x8xf32>
    %cst_16 = arith.constant dense<0.000000e+00> : vector<8x8xf32>
    %26 = tpu.matmul %3, %25, %cst_16 {dimension_numbers = #tpu.dot_dimension_numbers<[1], [0], [0], [1], [0, 0, 1, 1], [], []>} : vector<8x16xf32>, vector<16x8xf32>, vector<8x8xf32> -> vector<8x8xf32>
    %c3 = arith.constant 3 : index
    %c0_17 = arith.constant 0 : index
    %c0_18 = arith.constant 0 : index
    %27 = vector.load %arg8[%c3, %c0_17, %c0_18] : memref<4x8x8xf32, #tpu.memory_space<vmem>>, vector<1x8x8xf32>
    %28 = vector.shape_cast %27 : vector<1x8x8xf32> to vector<8x8xf32>
    %29 = vector.shape_cast %26 : vector<8x8xf32> to vector<1x8x8xf32>
    tpu.vector_store %arg8[%c3, %c0_17, %c0_18], %29 {strides = array<i32>} : memref<4x8x8xf32, #tpu.memory_space<vmem>>, vector<1x8x8xf32>,
    %c0_19 = arith.constant 0 : index
    %c0_20 = arith.constant 0 : index
    %30 = vector.load %arg4[%c0_19, %c0_20] : memref<16x4xf32, #tpu.memory_space<vmem>>, vector<16x4xf32>
    %c0_21 = arith.constant 0 : index
    %c0_22 = arith.constant 0 : index
    %31 = vector.load %arg5[%c0_21, %c0_22] : memref<4x16xf32, #tpu.memory_space<vmem>>, vector<4x16xf32>
    %cst_23 = arith.constant dense<0.000000e+00> : vector<64x4xf32>
    %32 = tpu.matmul %1, %30, %cst_23 {dimension_numbers = #tpu.dot_dimension_numbers<[1], [0], [0], [1], [0, 0, 1, 1], [], []>} : vector<64x16xf32>, vector<16x4xf32>, vector<64x4xf32> -> vector<64x4xf32>
    %33 = vector.shape_cast %32 : vector<64x4xf32> to vector<4x16x4xf32>
    %34 = vector.extract_strided_slice %33 {offsets = [0, 0, 0], sizes = [1, 16, 4], strides = [1, 1, 1]} : vector<4x16x4xf32> to vector<1x16x4xf32>
    %35 = vector.shape_cast %34 : vector<1x16x4xf32> to vector<16x4xf32>
    %cst_24 = arith.constant dense<0.000000e+00> : vector<4x4xf32>
    %36 = tpu.matmul %31, %35, %cst_24 {dimension_numbers = #tpu.dot_dimension_numbers<[1], [0], [0], [1], [0, 0, 1, 1], [], []>} : vector<4x16xf32>, vector<16x4xf32>, vector<4x4xf32> -> vector<4x4xf32>
    %c0_25 = arith.constant 0 : index
    %c0_26 = arith.constant 0 : index
    %c0_27 = arith.constant 0 : index
    %37 = vector.load %arg9[%c0_25, %c0_26, %c0_27] : memref<4x4x4xf32, #tpu.memory_space<vmem>>, vector<1x4x4xf32>
    %38 = vector.shape_cast %37 : vector<1x4x4xf32> to vector<4x4xf32>
    %39 = vector.shape_cast %36 : vector<4x4xf32> to vector<1x4x4xf32>
    tpu.vector_store %arg9[%c0_25, %c0_26, %c0_27], %39 {strides = array<i32>} : memref<4x4x4xf32, #tpu.memory_space<vmem>>, vector<1x4x4xf32>,
    %40 = vector.extract_strided_slice %33 {offsets = [1, 0, 0], sizes = [1, 16, 4], strides = [1, 1, 1]} : vector<4x16x4xf32> to vector<1x16x4xf32>
    %41 = vector.shape_cast %40 : vector<1x16x4xf32> to vector<16x4xf32>
    %cst_28 = arith.constant dense<0.000000e+00> : vector<4x4xf32>
    %42 = tpu.matmul %31, %41, %cst_28 {dimension_numbers = #tpu.dot_dimension_numbers<[1], [0], [0], [1], [0, 0, 1, 1], [], []>} : vector<4x16xf32>, vector<16x4xf32>, vector<4x4xf32> -> vector<4x4xf32>
    %c1_29 = arith.constant 1 : index
    %c0_30 = arith.constant 0 : index
    %c0_31 = arith.constant 0 : index
    %43 = vector.load %arg9[%c1_29, %c0_30, %c0_31] : memref<4x4x4xf32, #tpu.memory_space<vmem>>, vector<1x4x4xf32>
    %44 = vector.shape_cast %43 : vector<1x4x4xf32> to vector<4x4xf32>
    %45 = vector.shape_cast %42 : vector<4x4xf32> to vector<1x4x4xf32>
    tpu.vector_store %arg9[%c1_29, %c0_30, %c0_31], %45 {strides = array<i32>} : memref<4x4x4xf32, #tpu.memory_space<vmem>>, vector<1x4x4xf32>,
    %46 = vector.extract_strided_slice %33 {offsets = [2, 0, 0], sizes = [1, 16, 4], strides = [1, 1, 1]} : vector<4x16x4xf32> to vector<1x16x4xf32>
    %47 = vector.shape_cast %46 : vector<1x16x4xf32> to vector<16x4xf32>
    %cst_32 = arith.constant dense<0.000000e+00> : vector<4x4xf32>
    %48 = tpu.matmul %31, %47, %cst_32 {dimension_numbers = #tpu.dot_dimension_numbers<[1], [0], [0], [1], [0, 0, 1, 1], [], []>} : vector<4x16xf32>, vector<16x4xf32>, vector<4x4xf32> -> vector<4x4xf32>
    %c2_33 = arith.constant 2 : index
    %c0_34 = arith.constant 0 : index
    %c0_35 = arith.constant 0 : index
    %49 = vector.load %arg9[%c2_33, %c0_34, %c0_35] : memref<4x4x4xf32, #tpu.memory_space<vmem>>, vector<1x4x4xf32>
    %50 = vector.shape_cast %49 : vector<1x4x4xf32> to vector<4x4xf32>
    %51 = vector.shape_cast %48 : vector<4x4xf32> to vector<1x4x4xf32>
    tpu.vector_store %arg9[%c2_33, %c0_34, %c0_35], %51 {strides = array<i32>} : memref<4x4x4xf32, #tpu.memory_space<vmem>>, vector<1x4x4xf32>,
    %52 = vector.extract_strided_slice %33 {offsets = [3, 0, 0], sizes = [1, 16, 4], strides = [1, 1, 1]} : vector<4x16x4xf32> to vector<1x16x4xf32>
    %53 = vector.shape_cast %52 : vector<1x16x4xf32> to vector<16x4xf32>
    %cst_36 = arith.constant dense<0.000000e+00> : vector<4x4xf32>
    %54 = tpu.matmul %31, %53, %cst_36 {dimension_numbers = #tpu.dot_dimension_numbers<[1], [0], [0], [1], [0, 0, 1, 1], [], []>} : vector<4x16xf32>, vector<16x4xf32>, vector<4x4xf32> -> vector<4x4xf32>
    %c3_37 = arith.constant 3 : index
    %c0_38 = arith.constant 0 : index
    %c0_39 = arith.constant 0 : index
    %55 = vector.load %arg9[%c3_37, %c0_38, %c0_39] : memref<4x4x4xf32, #tpu.memory_space<vmem>>, vector<1x4x4xf32>
    %56 = vector.shape_cast %55 : vector<1x4x4xf32> to vector<4x4xf32>
    %57 = vector.shape_cast %54 : vector<4x4xf32> to vector<1x4x4xf32>
    tpu.vector_store %arg9[%c3_37, %c0_38, %c0_39], %57 {strides = array<i32>} : memref<4x4x4xf32, #tpu.memory_space<vmem>>, vector<1x4x4xf32>,
    %c0_40 = arith.constant 0 : index
    %c0_41 = arith.constant 0 : index
    %58 = vector.load %arg6[%c0_40, %c0_41] : memref<16x2xf32, #tpu.memory_space<vmem>>, vector<16x2xf32>
    %c0_42 = arith.constant 0 : index
    %c0_43 = arith.constant 0 : index
    %59 = vector.load %arg7[%c0_42, %c0_43] : memref<2x16xf32, #tpu.memory_space<vmem>>, vector<2x16xf32>
    %cst_44 = arith.constant dense<0.000000e+00> : vector<64x2xf32>
    %60 = tpu.matmul %1, %58, %cst_44 {dimension_numbers = #tpu.dot_dimension_numbers<[1], [0], [0], [1], [0, 0, 1, 1], [], []>} : vector<64x16xf32>, vector<16x2xf32>, vector<64x2xf32> -> vector<64x2xf32>
    %61 = vector.shape_cast %60 : vector<64x2xf32> to vector<4x16x2xf32>
    %62 = vector.extract_strided_slice %61 {offsets = [0, 0, 0], sizes = [1, 16, 2], strides = [1, 1, 1]} : vector<4x16x2xf32> to vector<1x16x2xf32>
    %63 = vector.shape_cast %62 : vector<1x16x2xf32> to vector<16x2xf32>
    %cst_45 = arith.constant dense<0.000000e+00> : vector<2x2xf32>
    %64 = tpu.matmul %59, %63, %cst_45 {dimension_numbers = #tpu.dot_dimension_numbers<[1], [0], [0], [1], [0, 0, 1, 1], [], []>} : vector<2x16xf32>, vector<16x2xf32>, vector<2x2xf32> -> vector<2x2xf32>
    %c0_46 = arith.constant 0 : index
    %c0_47 = arith.constant 0 : index
    %c0_48 = arith.constant 0 : index
    %65 = vector.load %arg10[%c0_46, %c0_47, %c0_48] : memref<4x2x2xf32, #tpu.memory_space<vmem>>, vector<1x2x2xf32>
    %66 = vector.shape_cast %65 : vector<1x2x2xf32> to vector<2x2xf32>
    %67 = vector.shape_cast %64 : vector<2x2xf32> to vector<1x2x2xf32>
    tpu.vector_store %arg10[%c0_46, %c0_47, %c0_48], %67 {strides = array<i32>} : memref<4x2x2xf32, #tpu.memory_space<vmem>>, vector<1x2x2xf32>,
    %68 = vector.extract_strided_slice %61 {offsets = [1, 0, 0], sizes = [1, 16, 2], strides = [1, 1, 1]} : vector<4x16x2xf32> to vector<1x16x2xf32>
    %69 = vector.shape_cast %68 : vector<1x16x2xf32> to vector<16x2xf32>
    %cst_49 = arith.constant dense<0.000000e+00> : vector<2x2xf32>
    %70 = tpu.matmul %59, %69, %cst_49 {dimension_numbers = #tpu.dot_dimension_numbers<[1], [0], [0], [1], [0, 0, 1, 1], [], []>} : vector<2x16xf32>, vector<16x2xf32>, vector<2x2xf32> -> vector<2x2xf32>
    %c1_50 = arith.constant 1 : index
    %c0_51 = arith.constant 0 : index
    %c0_52 = arith.constant 0 : index
    %71 = vector.load %arg10[%c1_50, %c0_51, %c0_52] : memref<4x2x2xf32, #tpu.memory_space<vmem>>, vector<1x2x2xf32>
    %72 = vector.shape_cast %71 : vector<1x2x2xf32> to vector<2x2xf32>
    %73 = vector.shape_cast %70 : vector<2x2xf32> to vector<1x2x2xf32>
    tpu.vector_store %arg10[%c1_50, %c0_51, %c0_52], %73 {strides = array<i32>} : memref<4x2x2xf32, #tpu.memory_space<vmem>>, vector<1x2x2xf32>,
    %74 = vector.extract_strided_slice %61 {offsets = [2, 0, 0], sizes = [1, 16, 2], strides = [1, 1, 1]} : vector<4x16x2xf32> to vector<1x16x2xf32>
    %75 = vector.shape_cast %74 : vector<1x16x2xf32> to vector<16x2xf32>
    %cst_53 = arith.constant dense<0.000000e+00> : vector<2x2xf32>
    %76 = tpu.matmul %59, %75, %cst_53 {dimension_numbers = #tpu.dot_dimension_numbers<[1], [0], [0], [1], [0, 0, 1, 1], [], []>} : vector<2x16xf32>, vector<16x2xf32>, vector<2x2xf32> -> vector<2x2xf32>
    %c2_54 = arith.constant 2 : index
    %c0_55 = arith.constant 0 : index
    %c0_56 = arith.constant 0 : index
    %77 = vector.load %arg10[%c2_54, %c0_55, %c0_56] : memref<4x2x2xf32, #tpu.memory_space<vmem>>, vector<1x2x2xf32>
    %78 = vector.shape_cast %77 : vector<1x2x2xf32> to vector<2x2xf32>
    %79 = vector.shape_cast %76 : vector<2x2xf32> to vector<1x2x2xf32>
    tpu.vector_store %arg10[%c2_54, %c0_55, %c0_56], %79 {strides = array<i32>} : memref<4x2x2xf32, #tpu.memory_space<vmem>>, vector<1x2x2xf32>,
    %80 = vector.extract_strided_slice %61 {offsets = [3, 0, 0], sizes = [1, 16, 2], strides = [1, 1, 1]} : vector<4x16x2xf32> to vector<1x16x2xf32>
    %81 = vector.shape_cast %80 : vector<1x16x2xf32> to vector<16x2xf32>
    %cst_57 = arith.constant dense<0.000000e+00> : vector<2x2xf32>
    %82 = tpu.matmul %59, %81, %cst_57 {dimension_numbers = #tpu.dot_dimension_numbers<[1], [0], [0], [1], [0, 0, 1, 1], [], []>} : vector<2x16xf32>, vector<16x2xf32>, vector<2x2xf32> -> vector<2x2xf32>
    %c3_58 = arith.constant 3 : index
    %c0_59 = arith.constant 0 : index
    %c0_60 = arith.constant 0 : index
    %83 = vector.load %arg10[%c3_58, %c0_59, %c0_60] : memref<4x2x2xf32, #tpu.memory_space<vmem>>, vector<1x2x2xf32>
    %84 = vector.shape_cast %83 : vector<1x2x2xf32> to vector<2x2xf32>
    %85 = vector.shape_cast %82 : vector<2x2xf32> to vector<1x2x2xf32>
    tpu.vector_store %arg10[%c3_58, %c0_59, %c0_60], %85 {strides = array<i32>} : memref<4x2x2xf32, #tpu.memory_space<vmem>>, vector<1x2x2xf32>,
    return
  }
  func.func @transform_0(%arg0: i32) -> (i32, i32, i32) {
    %c0_i32 = arith.constant 0 : i32
    %c0_i32_0 = arith.constant 0 : i32
    %c0_i32_1 = arith.constant 0 : i32
    return %arg0, %c0_i32, %c0_i32_0 : i32, i32, i32
  }
  func.func @transform_1(%arg0: i32) -> (i32, i32) {
    %c0_i32 = arith.constant 0 : i32
    %c0_i32_0 = arith.constant 0 : i32
    %c0_i32_1 = arith.constant 0 : i32
    return %c0_i32, %c0_i32_0 : i32, i32
  }
  func.func @transform_2(%arg0: i32) -> (i32, i32) {
    %c0_i32 = arith.constant 0 : i32
    %c0_i32_0 = arith.constant 0 : i32
    %c0_i32_1 = arith.constant 0 : i32
    return %c0_i32, %c0_i32_0 : i32, i32
  }
  func.func @transform_3(%arg0: i32) -> (i32, i32) {
    %c0_i32 = arith.constant 0 : i32
    %c0_i32_0 = arith.constant 0 : i32
    %c0_i32_1 = arith.constant 0 : i32
    return %c0_i32, %c0_i32_0 : i32, i32
  }
  func.func @transform_4(%arg0: i32) -> (i32, i32) {
    %c0_i32 = arith.constant 0 : i32
    %c0_i32_0 = arith.constant 0 : i32
    %c0_i32_1 = arith.constant 0 : i32
    return %c0_i32, %c0_i32_0 : i32, i32
  }
  func.func @transform_5(%arg0: i32) -> (i32, i32) {
    %c0_i32 = arith.constant 0 : i32
    %c0_i32_0 = arith.constant 0 : i32
    %c0_i32_1 = arith.constant 0 : i32
    return %c0_i32, %c0_i32_0 : i32, i32
  }
  func.func @transform_6(%arg0: i32) -> (i32, i32) {
    %c0_i32 = arith.constant 0 : i32
    %c0_i32_0 = arith.constant 0 : i32
    %c0_i32_1 = arith.constant 0 : i32
    return %c0_i32, %c0_i32_0 : i32, i32
  }
  func.func @transform_7(%arg0: i32) -> (i32, i32, i32) {
    %c0_i32 = arith.constant 0 : i32
    %c0_i32_0 = arith.constant 0 : i32
    %c0_i32_1 = arith.constant 0 : i32
    return %arg0, %c0_i32, %c0_i32_0 : i32, i32, i32
  }
  func.func @transform_8(%arg0: i32) -> (i32, i32, i32) {
    %c0_i32 = arith.constant 0 : i32
    %c0_i32_0 = arith.constant 0 : i32
    %c0_i32_1 = arith.constant 0 : i32
    return %arg0, %c0_i32, %c0_i32_0 : i32, i32, i32
  }
  func.func @transform_9(%arg0: i32) -> (i32, i32, i32) {
    %c0_i32 = arith.constant 0 : i32
    %c0_i32_0 = arith.constant 0 : i32
    %c0_i32_1 = arith.constant 0 : i32
    return %arg0, %c0_i32, %c0_i32_0 : i32, i32, i32
  }
}

</mosaic_0001>

<llo_original>
// kernel: tpu_custom_call.1
$region0: #{tpu_custom_call.1}
  #allocation0 [shape = 'u32[]', space=smem, size = 0x4, offset = 0x4, fixed_abs, tag = 'smem constant byte address 0x4 - core index']
  #allocation1 [shape = 'u32[72,128]{1,0:T(1,128)}', space=vmem, size = 0x9000, scoped, tag = 'internal scratch']
  %s0 = inlined_call_operand.hbm [shape: f32[8,16,16], index: 0, kind: input, shape index: {}]
  %s1 = inlined_call_operand.vmem [shape: f32[16,8], index: 1, kind: input, shape index: {}]
  %s2 = inlined_call_operand.vmem [shape: f32[8,16], index: 2, kind: input, shape index: {}]
  %s3 = inlined_call_operand.vmem [shape: f32[16,4], index: 3, kind: input, shape index: {}]
  %s4 = inlined_call_operand.vmem [shape: f32[4,16], index: 4, kind: input, shape index: {}]
  %s5 = inlined_call_operand.vmem [shape: f32[16,2], index: 5, kind: input, shape index: {}]
  %s6 = inlined_call_operand.vmem [shape: f32[2,16], index: 6, kind: input, shape index: {}]
  %s7 = inlined_call_operand.hbm [shape: f32[8,8,8], index: 7, kind: output, shape index: {0}]
  %s8 = inlined_call_operand.vmem [shape: f32[8,4,4], index: 8, kind: output, shape index: {1}]
  %s9 = inlined_call_operand.vmem [shape: f32[8,2,2], index: 9, kind: output, shape index: {2}]
  %10 = xla_tuple %s7, %s8, %s9
  %s11 = sld [smem:[#allocation0]]
  $region81: #{tpu_custom_call.1} parent=0
    _
  %s13 = ssub.s32 1, %s11
  %s14 = scalar_select 0, %s13, %s11
  $region1: #{tpu_custom_call.1} parent=0
    #allocation2 [shape = 'u8[65536]{0}', space=vmem, size = 0x10000, scoped, tag = 'input window, operand 0']
    #allocation3 [shape = 's32[2]{0}', space=sflag, size = 0x8, scoped, tag = 'scoped memory for tpu_custom_call.1']
    #allocation4 [shape = 's32[2]{0}', space=sflag, size = 0x8, scoped, tag = 'scoped memory for tpu_custom_call.1']
    #allocation5 [shape = 'u8[32768]{0}', space=vmem, size = 0x8000, scoped, tag = 'output window, operand 0']
    %15 = vsyncpa [#allocation3], 0
    %s16 = scalar_lea.sflag [#allocation3], 1
    %17 = vsyncpa %s16, 0
    %18 = vsyncpa [#allocation4], 0
    %s19 = scalar_lea.sflag [#allocation4], 1
    %20 = vsyncpa %s19, 0
    loop: start=0, step=1, limit=4
    $region2: #{tpu_custom_call.1} parent=1 // loop_pre_header
      _
    $region3: #{tpu_custom_call.1} parent=1 // loop_header
      %s22 = sphi 0, %s26
      %p23 = scmp.ge.s32.totalorder %s22, 4
      %s32 = sphi 0, %s34
      %s35 = sphi 0, %s32
      %s36 = sphi 0, %s35
      %s52 = sphi 0, %s36
      %s56 = sphi 0, %s56
      %s58 = sphi 0, %s56
      %s59 = sphi 0, %s58
      %s73 = sphi 0, %s59
      %s77 = sphi 0, %s77
      %s79 = sphi 0, %s77
      %s80 = sphi 0, %s79
      %s94 = sphi 0, %s80
      %s98 = sphi 0, %s98
      %s100 = sphi 0, %s98
      %s101 = sphi 0, %s100
      %s115 = sphi 0, %s101
      %s119 = sphi 0, %s119
      %s121 = sphi 0, %s119
      %s122 = sphi 0, %s121
      %s136 = sphi 0, %s122
      %s140 = sphi 0, %s140
      %s142 = sphi 0, %s140
      %s143 = sphi 0, %s142
      %s157 = sphi 0, %s143
      %s161 = sphi 0, %s161
      %s163 = sphi 0, %s161
      %s164 = sphi 0, %s163
      %s178 = sphi 0, %s164
      %s184 = sphi 0, %s186
      %s187 = sphi 0, %s184
      %s188 = sphi 0, %s187
      %s204 = sphi 0, %s188
      %s210 = sphi 0, %s212
      %s213 = sphi 0, %s210
      %s214 = sphi 0, %s213
      %s230 = sphi 0, %s214
      %s236 = sphi 0, %s238
      %s239 = sphi 0, %s236
      %s240 = sphi 0, %s239
      %s256 = sphi 0, %s240
    $region4: #{tpu_custom_call.1} parent=1 // loop_header_branch
      %25 = sbr.rel (%p23) target = $region8
    $region5: #{tpu_custom_call.1} parent=1 // loop_body
      %s27 = ssub.s32 %s22, 1
      %s28 = ssub.s32 %s22, 2
      %s29 = sadd.s32 %s22, 1
      %s30 = ssub.s32 %s22, %s29
      %p31 = scmp.eq.s32.totalorder %s30, 0
      %s33 = sadd.s32 %s32, 1
      %s34 = scalar_select %p31, %s32, %s33
      %p37 = pneg %p31
      %p38 = scmp.eq.s32.totalorder %s22, 1
      %p39 = por %p37, %p38
      %p40 = scmp.ne.s32.totalorder %s32, %s35
      %p41 = scmp.eq.s32.totalorder %s22, 0
      %p42 = por %p40, %p41
      %p43 = scmp.ne.s32.totalorder %s32, %s35
      %p44 = scmp.eq.s32.totalorder %s27, 1
      %p45 = por %p43, %p44
      %p46 = scmp.ne.s32.totalorder %s35, %s36
      %p47 = scmp.eq.s32.totalorder %s27, 0
      %p48 = por %p46, %p47
      %p49 = scmp.ne.s32.totalorder %s35, %s36
      %p50 = scmp.eq.s32.totalorder %s28, 1
      %p51 = por %p49, %p50
      %p53 = scmp.ne.s32.totalorder %s36, %s52
      %p54 = scmp.eq.s32.totalorder %s28, 0
      %p55 = por %p53, %p54
      %s57 = sadd.s32 %s56, 1
      %p60 = scmp.eq.s32.totalorder %s22, 1
      %p61 = scmp.ne.s32.totalorder %s56, %s58
      %p62 = scmp.eq.s32.totalorder %s22, 0
      %p63 = por %p61, %p62
      %p64 = scmp.ne.s32.totalorder %s56, %s58
      %p65 = scmp.eq.s32.totalorder %s27, 1
      %p66 = por %p64, %p65
      %p67 = scmp.ne.s32.totalorder %s58, %s59
      %p68 = scmp.eq.s32.totalorder %s27, 0
      %p69 = por %p67, %p68
      %p70 = scmp.ne.s32.totalorder %s58, %s59
      %p71 = scmp.eq.s32.totalorder %s28, 1
      %p72 = por %p70, %p71
      %p74 = scmp.ne.s32.totalorder %s59, %s73
      %p75 = scmp.eq.s32.totalorder %s28, 0
      %p76 = por %p74, %p75
      %s78 = sadd.s32 %s77, 1
      %p81 = scmp.eq.s32.totalorder %s22, 1
      %p82 = scmp.ne.s32.totalorder %s77, %s79
      %p83 = scmp.eq.s32.totalorder %s22, 0
      %p84 = por %p82, %p83
      %p85 = scmp.ne.s32.totalorder %s77, %s79
      %p86 = scmp.eq.s32.totalorder %s27, 1
      %p87 = por %p85, %p86
      %p88 = scmp.ne.s32.totalorder %s79, %s80
      %p89 = scmp.eq.s32.totalorder %s27, 0
      %p90 = por %p88, %p89
      %p91 = scmp.ne.s32.totalorder %s79, %s80
      %p92 = scmp.eq.s32.totalorder %s28, 1
      %p93 = por %p91, %p92
      %p95 = scmp.ne.s32.totalorder %s80, %s94
      %p96 = scmp.eq.s32.totalorder %s28, 0
      %p97 = por %p95, %p96
      %s99 = sadd.s32 %s98, 1
      %p102 = scmp.eq.s32.totalorder %s22, 1
      %p103 = scmp.ne.s32.totalorder %s98, %s100
      %p104 = scmp.eq.s32.totalorder %s22, 0
      %p105 = por %p103, %p104
      %p106 = scmp.ne.s32.totalorder %s98, %s100
      %p107 = scmp.eq.s32.totalorder %s27, 1
      %p108 = por %p106, %p107
      %p109 = scmp.ne.s32.totalorder %s100, %s101
      %p110 = scmp.eq.s32.totalorder %s27, 0
      %p111 = por %p109, %p110
      %p112 = scmp.ne.s32.totalorder %s100, %s101
      %p113 = scmp.eq.s32.totalorder %s28, 1
      %p114 = por %p112, %p113
      %p116 = scmp.ne.s32.totalorder %s101, %s115
      %p117 = scmp.eq.s32.totalorder %s28, 0
      %p118 = por %p116, %p117
      %s120 = sadd.s32 %s119, 1
      %p123 = scmp.eq.s32.totalorder %s22, 1
      %p124 = scmp.ne.s32.totalorder %s119, %s121
      %p125 = scmp.eq.s32.totalorder %s22, 0
      %p126 = por %p124, %p125
      %p127 = scmp.ne.s32.totalorder %s119, %s121
      %p128 = scmp.eq.s32.totalorder %s27, 1
      %p129 = por %p127, %p128
      %p130 = scmp.ne.s32.totalorder %s121, %s122
      %p131 = scmp.eq.s32.totalorder %s27, 0
      %p132 = por %p130, %p131
      %p133 = scmp.ne.s32.totalorder %s121, %s122
      %p134 = scmp.eq.s32.totalorder %s28, 1
      %p135 = por %p133, %p134
      %p137 = scmp.ne.s32.totalorder %s122, %s136
      %p138 = scmp.eq.s32.totalorder %s28, 0
      %p139 = por %p137, %p138
      %s141 = sadd.s32 %s140, 1
      %p144 = scmp.eq.s32.totalorder %s22, 1
      %p145 = scmp.ne.s32.totalorder %s140, %s142
      %p146 = scmp.eq.s32.totalorder %s22, 0
      %p147 = por %p145, %p146
      %p148 = scmp.ne.s32.totalorder %s140, %s142
      %p149 = scmp.eq.s32.totalorder %s27, 1
      %p150 = por %p148, %p149
      %p151 = scmp.ne.s32.totalorder %s142, %s143
      %p152 = scmp.eq.s32.totalorder %s27, 0
      %p153 = por %p151, %p152
      %p154 = scmp.ne.s32.totalorder %s142, %s143
      %p155 = scmp.eq.s32.totalorder %s28, 1
      %p156 = por %p154, %p155
      %p158 = scmp.ne.s32.totalorder %s143, %s157
      %p159 = scmp.eq.s32.totalorder %s28, 0
      %p160 = por %p158, %p159
      %s162 = sadd.s32 %s161, 1
      %p165 = scmp.eq.s32.totalorder %s22, 1
      %p166 = scmp.ne.s32.totalorder %s161, %s163
      %p167 = scmp.eq.s32.totalorder %s22, 0
      %p168 = por %p166, %p167
      %p169 = scmp.ne.s32.totalorder %s161, %s163
      %p170 = scmp.eq.s32.totalorder %s27, 1
      %p171 = por %p169, %p170
      %p172 = scmp.ne.s32.totalorder %s163, %s164
      %p173 = scmp.eq.s32.totalorder %s27, 0
      %p174 = por %p172, %p173
      %p175 = scmp.ne.s32.totalorder %s163, %s164
      %p176 = scmp.eq.s32.totalorder %s28, 1
      %p177 = por %p175, %p176
      %p179 = scmp.ne.s32.totalorder %s164, %s178
      %p180 = scmp.eq.s32.totalorder %s28, 0
      %p181 = por %p179, %p180
      %s182 = ssub.s32 %s22, %s29
      %p183 = scmp.eq.s32.totalorder %s182, 0
      %s185 = sadd.s32 %s184, 1
      %s186 = scalar_select %p183, %s184, %s185
      %p189 = pneg %p183
      %p190 = scmp.eq.s32.totalorder %s22, 1
      %p191 = por %p189, %p190
      %p192 = scmp.ne.s32.totalorder %s184, %s187
      %p193 = scmp.eq.s32.totalorder %s22, 0
      %p194 = por %p192, %p193
      %p195 = scmp.ne.s32.totalorder %s184, %s187
      %p196 = scmp.eq.s32.totalorder %s27, 1
      %p197 = por %p195, %p196
      %p198 = scmp.ne.s32.totalorder %s187, %s188
      %p199 = scmp.eq.s32.totalorder %s27, 0
      %p200 = por %p198, %p199
      %p201 = scmp.ne.s32.totalorder %s187, %s188
      %p202 = scmp.eq.s32.totalorder %s28, 1
      %p203 = por %p201, %p202
      %p205 = scmp.ne.s32.totalorder %s188, %s204
      %p206 = scmp.eq.s32.totalorder %s28, 0
      %p207 = por %p205, %p206
      %s208 = ssub.s32 %s22, %s29
      %p209 = scmp.eq.s32.totalorder %s208, 0
      %s211 = sadd.s32 %s210, 1
      %s212 = scalar_select %p209, %s210, %s211
      %p215 = pneg %p209
      %p216 = scmp.eq.s32.totalorder %s22, 1
      %p217 = por %p215, %p216
      %p218 = scmp.ne.s32.totalorder %s210, %s213
      %p219 = scmp.eq.s32.totalorder %s22, 0
      %p220 = por %p218, %p219
      %p221 = scmp.ne.s32.totalorder %s210, %s213
      %p222 = scmp.eq.s32.totalorder %s27, 1
      %p223 = por %p221, %p222
      %p224 = scmp.ne.s32.totalorder %s213, %s214
      %p225 = scmp.eq.s32.totalorder %s27, 0
      %p226 = por %p224, %p225
      %p227 = scmp.ne.s32.totalorder %s213, %s214
      %p228 = scmp.eq.s32.totalorder %s28, 1
      %p229 = por %p227, %p228
      %p231 = scmp.ne.s32.totalorder %s214, %s230
      %p232 = scmp.eq.s32.totalorder %s28, 0
      %p233 = por %p231, %p232
      %s234 = ssub.s32 %s22, %s29
      %p235 = scmp.eq.s32.totalorder %s234, 0
      %s237 = sadd.s32 %s236, 1
      %s238 = scalar_select %p235, %s236, %s237
      %p241 = pneg %p235
      %p242 = scmp.eq.s32.totalorder %s22, 1
      %p243 = por %p241, %p242
      %p244 = scmp.ne.s32.totalorder %s236, %s239
      %p245 = scmp.eq.s32.totalorder %s22, 0
      %p246 = por %p244, %p245
      %p247 = scmp.ne.s32.totalorder %s236, %s239
      %p248 = scmp.eq.s32.totalorder %s27, 1
      %p249 = por %p247, %p248
      %p250 = scmp.ne.s32.totalorder %s239, %s240
      %p251 = scmp.eq.s32.totalorder %s27, 0
      %p252 = por %p250, %p251
      %p253 = scmp.ne.s32.totalorder %s239, %s240
      %p254 = scmp.eq.s32.totalorder %s28, 1
      %p255 = por %p253, %p254
      %p257 = scmp.ne.s32.totalorder %s240, %s256
      %p258 = scmp.eq.s32.totalorder %s28, 0
      %p259 = por %p257, %p258
      %p260 = scmp.le.s32.totalorder 1, %s22
      %p261 = scmp.lt.s32.totalorder %s22, 3
      %p262 = pnand %p260, %p261
      %p263 = pneg %p262
      // Predicated region
      $region9: #{tpu_custom_call.1} parent=5 // pred_check
        _
      $region10: #{tpu_custom_call.1} parent=5 // pred_check_branch
        %265 = sbr.rel (%p262) target = $region12
      $region11: #{tpu_custom_call.1} parent=5 // pred_region
        %s266 = ssub.s32 %s22, 1
        // Predicated region
        $region13: #{tpu_custom_call.1} parent=11 // pred_check
          %p267 = pneg %p69
        $region14: #{tpu_custom_call.1} parent=11 // pred_check_branch
          %269 = sbr.rel (%p267) target = $region16
        $region15: #{tpu_custom_call.1} parent=11 // pred_region
          _
        $region16: #{tpu_custom_call.1} parent=11 // pred_fallthru
          _
        // Predicated region
        $region17: #{tpu_custom_call.1} parent=11 // pred_check
          %p270 = pneg %p90
        $region18: #{tpu_custom_call.1} parent=11 // pred_check_branch
          %272 = sbr.rel (%p270) target = $region20
        $region19: #{tpu_custom_call.1} parent=11 // pred_region
          _
        $region20: #{tpu_custom_call.1} parent=11 // pred_fallthru
          _
        // Predicated region
        $region21: #{tpu_custom_call.1} parent=11 // pred_check
          %p273 = pneg %p111
        $region22: #{tpu_custom_call.1} parent=11 // pred_check_branch
          %275 = sbr.rel (%p273) target = $region24
        $region23: #{tpu_custom_call.1} parent=11 // pred_region
          _
        $region24: #{tpu_custom_call.1} parent=11 // pred_fallthru
          _
        // Predicated region
        $region25: #{tpu_custom_call.1} parent=11 // pred_check
          %p276 = pneg %p132
        $region26: #{tpu_custom_call.1} parent=11 // pred_check_branch
          %278 = sbr.rel (%p276) target = $region28
        $region27: #{tpu_custom_call.1} parent=11 // pred_region
          _
        $region28: #{tpu_custom_call.1} parent=11 // pred_fallthru
          _
        // Predicated region
        $region29: #{tpu_custom_call.1} parent=11 // pred_check
          %p279 = pneg %p153
        $region30: #{tpu_custom_call.1} parent=11 // pred_check_branch
          %281 = sbr.rel (%p279) target = $region32
        $region31: #{tpu_custom_call.1} parent=11 // pred_region
          _
        $region32: #{tpu_custom_call.1} parent=11 // pred_fallthru
          _
        // Predicated region
        $region33: #{tpu_custom_call.1} parent=11 // pred_check
          %p282 = pneg %p174
        $region34: #{tpu_custom_call.1} parent=11 // pred_check_branch
          %284 = sbr.rel (%p282) target = $region36
        $region35: #{tpu_custom_call.1} parent=11 // pred_region
          _
        $region36: #{tpu_custom_call.1} parent=11 // pred_fallthru
          _
      $region12: #{tpu_custom_call.1} parent=5 // pred_fallthru
        _
      %p285 = scmp.lt.s32.totalorder %s22, 2
      // Predicated region
      $region37: #{tpu_custom_call.1} parent=5 // pred_check
        %p286 = pneg %p285
      $region38: #{tpu_custom_call.1} parent=5 // pred_check_branch
        %288 = sbr.rel (%p286) target = $region40
      $region39: #{tpu_custom_call.1} parent=5 // pred_region
        // Predicated region
        $region41: #{tpu_custom_call.1} parent=39 // pred_check
          %p289 = pneg %p42
        $region42: #{tpu_custom_call.1} parent=39 // pred_check_branch
          %291 = sbr.rel (%p289) target = $region44
        $region43: #{tpu_custom_call.1} parent=39 // pred_region
          %s292 = sand.u32 %s32, 1
          %s293 = scalar_lea.sflag [#allocation3], %s292
          %s294 = sand.u32 %s32, 1
          %s295 = smul.addr %s294, 64
          %s296 = scalar_lea.vmem [#allocation2], %s295
          %s297 = smul.u32 4, %s22
          %299 = vsyncadd %s293, 0
          %s300 = smul.addr %s297, 2
          %s301 = smul.addr %s300, 8
          %s302 = scalar_lea.hbm %s0, %s301
          %s303 = sshll.u32 %s302, 4
          %s304 = int_to_ptr.hbm [resolvable:$true] %s303
          %s305 = sshll.u32 %s296, 4
          %s306 = int_to_ptr.vmem [resolvable:$true] %s305
          %311 = dma.hbm_to_vmem [thread:$0]  %s304, 1024, %s306, %s293, 128, 128, 8
        $region44: #{tpu_custom_call.1} parent=39 // pred_fallthru
          _
      $region40: #{tpu_custom_call.1} parent=5 // pred_fallthru
        _
      %p312 = scmp.le.s32.totalorder 1, %s22
      %p313 = scmp.lt.s32.totalorder %s22, 3
      %p314 = pnand %p312, %p313
      %p315 = pneg %p314
      // Predicated region
      $region45: #{tpu_custom_call.1} parent=5 // pred_check
        _
      $region46: #{tpu_custom_call.1} parent=5 // pred_check_branch
        %317 = sbr.rel (%p314) target = $region48
      $region47: #{tpu_custom_call.1} parent=5 // pred_region
        %s318 = ssub.s32 %s22, 1
        %s319 = sand.u32 %s35, 1
        %s320 = scalar_lea.sflag [#allocation3], %s319
        %s321 = sand.u32 %s35, 1
        %s322 = smul.addr %s321, 64
        %s323 = scalar_lea.vmem [#allocation2], %s322
        // Predicated region
        $region49: #{tpu_custom_call.1} parent=47 // pred_check
          %p324 = pneg %p48
        $region50: #{tpu_custom_call.1} parent=47 // pred_check_branch
          %326 = sbr.rel (%p324) target = $region52
        $region51: #{tpu_custom_call.1} parent=47 // pred_region
          %328 = dma.done %s320, 1024
        $region52: #{tpu_custom_call.1} parent=47 // pred_fallthru
          _
        %s329 = sand.u32 %s35, 1
        %s330 = scalar_lea.sflag [#allocation3], %s329
        %s331 = sand.u32 %s35, 1
        %s332 = smul.addr %s331, 64
        %s333 = scalar_lea.vmem [#allocation2], %s332
        %p334 = pneg %p48
        %p335 = pneg %p45
        %p336 = pneg %p69
        %p337 = pneg %p66
        %p338 = pneg %p90
        %p339 = pneg %p87
        %p340 = pneg %p111
        %p341 = pneg %p108
        %p342 = pneg %p132
        %p343 = pneg %p129
        %p344 = pneg %p153
        %p345 = pneg %p150
        %p346 = pneg %p174
        %p347 = pneg %p171
        %p348 = pneg %p200
        %p349 = pneg %p197
        %s350 = sand.u32 %s187, 1
        %s351 = scalar_lea.sflag [#allocation4], %s350
        %s352 = sand.u32 %s187, 1
        %s353 = smul.addr %s352, 32
        %s354 = scalar_lea.vmem [#allocation5], %s353
        %p355 = pneg %p226
        %p356 = pneg %p223
        %s357 = smul.u32 4, %s27
        %p358 = scmp.lt.s32.totalorder %s357, 7
        %s359 = scalar_select %p358, %s357, 7
        %s360 = smul.addr %s359, 4
        %s361 = scalar_lea.vmem %s8, %s360
        %p362 = pneg %p252
        %p363 = pneg %p249
        %s364 = smul.u32 4, %s27
        %p365 = scmp.lt.s32.totalorder %s364, 7
        %s366 = scalar_select %p365, %s364, 7
        %s367 = smul.addr %s366, 2
        %s368 = scalar_lea.vmem %s9, %s367
        %s369 = smul.u32 4, %s27
        %s370 = smul.u32 4, %s27
        %s371 = smul.u32 4, %s27
        %p372 = scmp.lt.s32.totalorder %s371, 7
        %s373 = scalar_select %p372, %s371, 7
        %s374 = smul.addr %s373, 4
        %s375 = scalar_lea.vmem %s8, %s374
        %s376 = smul.u32 4, %s27
        %s377 = smul.u32 4, %s27
        %p378 = scmp.lt.s32.totalorder %s377, 7
        %s379 = scalar_select %p378, %s377, 7
        %s380 = smul.addr %s379, 2
        %s381 = scalar_lea.vmem %s9, %s380
        %s382 = smul.u32 4, %s27
        %v383 = vld [vmem:[%s323] sm:$0xff]
        %v384 = vld [vmem:[%s323 + $0x8] sm:$0xff]
        %v385 = vld [vmem:[%s323 + $0x10] sm:$0xff]
        %v386 = vld [vmem:[%s323 + $0x18] sm:$0xff]
        %v387 = vld [vmem:[%s323 + $0x20] sm:$0xff]
        %v388 = vld [vmem:[%s323 + $0x28] sm:$0xff]
        %v389 = vld [vmem:[%s323 + $0x30] sm:$0xff]
        %v390 = vld [vmem:[%s323 + $0x38] sm:$0xff]
        %v391 = vld [vmem:[%s1] sm:$0xff]
        %v392 = vld [vmem:[%s1 + $0x8] sm:$0xff]
        %v393 = vld [vmem:[%s2] sm:$0xff]
        %vm394 = vcmask 130048
        %v396 = vsel %vm394, %v383, 0
        %v399 = vsel %vm394, %v384, 0
        %v402 = vsel %vm394, %v385, 0
        %v405 = vsel %vm394, %v386, 0
        %v408 = vsel %vm394, %v387, 0
        %v411 = vsel %vm394, %v388, 0
        %v414 = vsel %vm394, %v389, 0
        %v417 = vsel %vm394, %v390, 0
        %419 = vmatpush.msra.mxu0 0.0
        %420 = vmatpush.msra.mxu0 0.0
        %421 = vmatpush.msra.mxu0 0.0
        %422 = vmatpush.msra.mxu0 0.0
        %423 = vmatpush.msra.mxu0 0.0
        %424 = vmatpush.msra.mxu0 0.0
        %425 = vmatpush.msra.mxu0 0.0
        %426 = vmatpush.msra.mxu0 0.0
        %427 = vmatpush.msra.mxu0 0.0
        %428 = vmatpush.msra.mxu0 0.0
        %429 = vmatpush.msra.mxu0 0.0
        %430 = vmatpush.msra.mxu0 0.0
        %431 = vmatpush.msra.mxu0 0.0
        %432 = vmatpush.msra.mxu0 0.0
        %433 = vmatpush.msra.mxu0 %v392
        %434 = vmatpush.msra.mxu0 %v391
        %435 = vmatmul.f32.gmra.mxu0 %v396
        %v436 = vpop.f32.mrf.mxu0
        %v437 = vadd.f32 0.0, %v436
        %438 = vmatmul.f32.gmra.mxu0 %v399
        %v439 = vpop.f32.mrf.mxu0
        %v440 = vadd.f32 0.0, %v439
        %441 = vmatmul.f32.gmra.mxu0 %v402
        %v442 = vpop.f32.mrf.mxu0
        %v443 = vadd.f32 0.0, %v442
        %444 = vmatmul.f32.gmra.mxu0 %v405
        %v445 = vpop.f32.mrf.mxu0
        %v446 = vadd.f32 0.0, %v445
        %447 = vmatmul.f32.gmra.mxu0 %v408
        %v448 = vpop.f32.mrf.mxu0
        %v449 = vadd.f32 0.0, %v448
        %450 = vmatmul.f32.gmra.mxu0 %v411
        %v451 = vpop.f32.mrf.mxu0
        %v452 = vadd.f32 0.0, %v451
        %453 = vmatmul.f32.gmra.mxu0 %v414
        %v454 = vpop.f32.mrf.mxu0
        %v455 = vadd.f32 0.0, %v454
        %456 = vmatmul.f32.gmra.mxu0 %v417
        %v457 = vpop.f32.mrf.mxu0
        %v458 = vadd.f32 0.0, %v457
        %459 = vdwg.mxu0
        %v461 = vsel %vm394, %v393, 0
        %463 = vmatpush.msra.mxu0 0.0
        %464 = vmatpush.msra.mxu0 0.0
        %465 = vmatpush.msra.mxu0 0.0
        %466 = vmatpush.msra.mxu0 0.0
        %467 = vmatpush.msra.mxu0 0.0
        %468 = vmatpush.msra.mxu0 0.0
        %469 = vmatpush.msra.mxu0 0.0
        %470 = vmatpush.msra.mxu0 0.0
        %471 = vmatpush.msra.mxu0 0.0
        %472 = vmatpush.msra.mxu0 0.0
        %473 = vmatpush.msra.mxu0 0.0
        %474 = vmatpush.msra.mxu0 0.0
        %475 = vmatpush.msra.mxu0 0.0
        %476 = vmatpush.msra.mxu0 0.0
        %477 = vmatpush.msra.mxu0 %v440
        %478 = vmatpush.msra.mxu0 %v437
        %479 = vmatmul.f32.gmra.mxu0 %v461
        %v480 = vpop.f32.mrf.mxu0
        %v481 = vadd.f32 0.0, %v480
        %482 = vdwg.mxu0
        %vm483 = vcmask 64512
        %484 = vst.msk [vmem:[%s354] sm:$0xff] %vm483, %v481
        %485 = vmatpush.msra.mxu0 0.0
        %486 = vmatpush.msra.mxu0 0.0
        %487 = vmatpush.msra.mxu0 0.0
        %488 = vmatpush.msra.mxu0 0.0
        %489 = vmatpush.msra.mxu0 0.0
        %490 = vmatpush.msra.mxu0 0.0
        %491 = vmatpush.msra.mxu0 0.0
        %492 = vmatpush.msra.mxu0 0.0
        %493 = vmatpush.msra.mxu0 0.0
        %494 = vmatpush.msra.mxu0 0.0
        %495 = vmatpush.msra.mxu0 0.0
        %496 = vmatpush.msra.mxu0 0.0
        %497 = vmatpush.msra.mxu0 0.0
        %498 = vmatpush.msra.mxu0 0.0
        %499 = vmatpush.msra.mxu0 %v446
        %500 = vmatpush.msra.mxu0 %v443
        %501 = vmatmul.f32.gmra.mxu0 %v461
        %v502 = vpop.f32.mrf.mxu0
        %v503 = vadd.f32 0.0, %v502
        %504 = vdwg.mxu0
        %s505 = scalar_lea.vmem %s354, 8 [#allocation5]
        %506 = vst.msk [vmem:[%s505] sm:$0xff] %vm483, %v503
        %507 = vmatpush.msra.mxu0 0.0
        %508 = vmatpush.msra.mxu0 0.0
        %509 = vmatpush.msra.mxu0 0.0
        %510 = vmatpush.msra.mxu0 0.0
        %511 = vmatpush.msra.mxu0 0.0
        %512 = vmatpush.msra.mxu0 0.0
        %513 = vmatpush.msra.mxu0 0.0
        %514 = vmatpush.msra.mxu0 0.0
        %515 = vmatpush.msra.mxu0 0.0
        %516 = vmatpush.msra.mxu0 0.0
        %517 = vmatpush.msra.mxu0 0.0
        %518 = vmatpush.msra.mxu0 0.0
        %519 = vmatpush.msra.mxu0 0.0
        %520 = vmatpush.msra.mxu0 0.0
        %521 = vmatpush.msra.mxu0 %v452
        %522 = vmatpush.msra.mxu0 %v449
        %523 = vmatmul.f32.gmra.mxu0 %v461
        %v524 = vpop.f32.mrf.mxu0
        %v525 = vadd.f32 0.0, %v524
        %526 = vdwg.mxu0
        %s527 = scalar_lea.vmem %s354, 16 [#allocation5]
        %528 = vst.msk [vmem:[%s527] sm:$0xff] %vm483, %v525
        %529 = vmatpush.msra.mxu0 0.0
        %530 = vmatpush.msra.mxu0 0.0
        %531 = vmatpush.msra.mxu0 0.0
        %532 = vmatpush.msra.mxu0 0.0
        %533 = vmatpush.msra.mxu0 0.0
        %534 = vmatpush.msra.mxu0 0.0
        %535 = vmatpush.msra.mxu0 0.0
        %536 = vmatpush.msra.mxu0 0.0
        %537 = vmatpush.msra.mxu0 0.0
        %538 = vmatpush.msra.mxu0 0.0
        %539 = vmatpush.msra.mxu0 0.0
        %540 = vmatpush.msra.mxu0 0.0
        %541 = vmatpush.msra.mxu0 0.0
        %542 = vmatpush.msra.mxu0 0.0
        %543 = vmatpush.msra.mxu0 %v458
        %544 = vmatpush.msra.mxu0 %v455
        %545 = vmatmul.f32.gmra.mxu0 %v461
        %v546 = vpop.f32.mrf.mxu0
        %v547 = vadd.f32 0.0, %v546
        %548 = vdwg.mxu0
        %s549 = scalar_lea.vmem %s354, 24 [#allocation5]
        %550 = vst.msk [vmem:[%s549] sm:$0xff] %vm483, %v547
        %v551 = vld [vmem:[%s3] sm:$0xff]
        %v552 = vld [vmem:[%s3 + $0x8] sm:$0xff]
        %v553 = vld [vmem:[%s4] sm:$0xf]
        %554 = vmatpush.msra.mxu0 0.0
        %555 = vmatpush.msra.mxu0 0.0
        %556 = vmatpush.msra.mxu0 0.0
        %557 = vmatpush.msra.mxu0 0.0
        %558 = vmatpush.msra.mxu0 0.0
        %559 = vmatpush.msra.mxu0 0.0
        %560 = vmatpush.msra.mxu0 0.0
        %561 = vmatpush.msra.mxu0 0.0
        %562 = vmatpush.msra.mxu0 0.0
        %563 = vmatpush.msra.mxu0 0.0
        %564 = vmatpush.msra.mxu0 0.0
        %565 = vmatpush.msra.mxu0 0.0
        %566 = vmatpush.msra.mxu0 0.0
        %567 = vmatpush.msra.mxu0 0.0
        %568 = vmatpush.msra.mxu0 %v552
        %569 = vmatpush.msra.mxu0 %v551
        %570 = vmatmul.f32.gmra.mxu0 %v396
        %v571 = vpop.f32.mrf.mxu0
        %v572 = vadd.f32 0.0, %v571
        %573 = vmatmul.f32.gmra.mxu0 %v399
        %v574 = vpop.f32.mrf.mxu0
        %v575 = vadd.f32 0.0, %v574
        %576 = vmatmul.f32.gmra.mxu0 %v402
        %v577 = vpop.f32.mrf.mxu0
        %v578 = vadd.f32 0.0, %v577
        %579 = vmatmul.f32.gmra.mxu0 %v405
        %v580 = vpop.f32.mrf.mxu0
        %v581 = vadd.f32 0.0, %v580
        %582 = vmatmul.f32.gmra.mxu0 %v408
        %v583 = vpop.f32.mrf.mxu0
        %v584 = vadd.f32 0.0, %v583
        %585 = vmatmul.f32.gmra.mxu0 %v411
        %v586 = vpop.f32.mrf.mxu0
        %v587 = vadd.f32 0.0, %v586
        %588 = vmatmul.f32.gmra.mxu0 %v414
        %v589 = vpop.f32.mrf.mxu0
        %v590 = vadd.f32 0.0, %v589
        %591 = vmatmul.f32.gmra.mxu0 %v417
        %v592 = vpop.f32.mrf.mxu0
        %v593 = vadd.f32 0.0, %v592
        %594 = vdwg.mxu0
        %v596 = vsel %vm394, %v553, 0
        %598 = vmatpush.msra.mxu0 0.0
        %599 = vmatpush.msra.mxu0 0.0
        %600 = vmatpush.msra.mxu0 0.0
        %601 = vmatpush.msra.mxu0 0.0
        %602 = vmatpush.msra.mxu0 0.0
        %603 = vmatpush.msra.mxu0 0.0
        %604 = vmatpush.msra.mxu0 0.0
        %605 = vmatpush.msra.mxu0 0.0
        %606 = vmatpush.msra.mxu0 0.0
        %607 = vmatpush.msra.mxu0 0.0
        %608 = vmatpush.msra.mxu0 0.0
        %609 = vmatpush.msra.mxu0 0.0
        %610 = vmatpush.msra.mxu0 0.0
        %611 = vmatpush.msra.mxu0 0.0
        %612 = vmatpush.msra.mxu0 %v575
        %613 = vmatpush.msra.mxu0 %v572
        %614 = vmatmul.f32.gmra.mxu0 %v596
        %v615 = vpop.f32.mrf.mxu0
        %v616 = vadd.f32 0.0, %v615
        %617 = vdwg.mxu0
        %vm618 = vcmask 27648
        %619 = vst.msk [vmem:[%s375] sm:$0xf] %vm618, %v616
        %620 = vmatpush.msra.mxu0 0.0
        %621 = vmatpush.msra.mxu0 0.0
        %622 = vmatpush.msra.mxu0 0.0
        %623 = vmatpush.msra.mxu0 0.0
        %624 = vmatpush.msra.mxu0 0.0
        %625 = vmatpush.msra.mxu0 0.0
        %626 = vmatpush.msra.mxu0 0.0
        %627 = vmatpush.msra.mxu0 0.0
        %628 = vmatpush.msra.mxu0 0.0
        %629 = vmatpush.msra.mxu0 0.0
        %630 = vmatpush.msra.mxu0 0.0
        %631 = vmatpush.msra.mxu0 0.0
        %632 = vmatpush.msra.mxu0 0.0
        %633 = vmatpush.msra.mxu0 0.0
        %634 = vmatpush.msra.mxu0 %v581
        %635 = vmatpush.msra.mxu0 %v578
        %636 = vmatmul.f32.gmra.mxu0 %v596
        %v637 = vpop.f32.mrf.mxu0
        %v638 = vadd.f32 0.0, %v637
        %639 = vdwg.mxu0
        %s640 = scalar_lea.vmem %s375, 4
        %641 = vst.msk [vmem:[%s640] sm:$0xf] %vm618, %v638
        %642 = vmatpush.msra.mxu0 0.0
        %643 = vmatpush.msra.mxu0 0.0
        %644 = vmatpush.msra.mxu0 0.0
        %645 = vmatpush.msra.mxu0 0.0
        %646 = vmatpush.msra.mxu0 0.0
        %647 = vmatpush.msra.mxu0 0.0
        %648 = vmatpush.msra.mxu0 0.0
        %649 = vmatpush.msra.mxu0 0.0
        %650 = vmatpush.msra.mxu0 0.0
        %651 = vmatpush.msra.mxu0 0.0
        %652 = vmatpush.msra.mxu0 0.0
        %653 = vmatpush.msra.mxu0 0.0
        %654 = vmatpush.msra.mxu0 0.0
        %655 = vmatpush.msra.mxu0 0.0
        %656 = vmatpush.msra.mxu0 %v587
        %657 = vmatpush.msra.mxu0 %v584
        %658 = vmatmul.f32.gmra.mxu0 %v596
        %v659 = vpop.f32.mrf.mxu0
        %v660 = vadd.f32 0.0, %v659
        %661 = vdwg.mxu0
        %s662 = scalar_lea.vmem %s375, 8
        %663 = vst.msk [vmem:[%s662] sm:$0xf] %vm618, %v660
        %664 = vmatpush.msra.mxu0 0.0
        %665 = vmatpush.msra.mxu0 0.0
        %666 = vmatpush.msra.mxu0 0.0
        %667 = vmatpush.msra.mxu0 0.0
        %668 = vmatpush.msra.mxu0 0.0
        %669 = vmatpush.msra.mxu0 0.0
        %670 = vmatpush.msra.mxu0 0.0
        %671 = vmatpush.msra.mxu0 0.0
        %672 = vmatpush.msra.mxu0 0.0
        %673 = vmatpush.msra.mxu0 0.0
        %674 = vmatpush.msra.mxu0 0.0
        %675 = vmatpush.msra.mxu0 0.0
        %676 = vmatpush.msra.mxu0 0.0
        %677 = vmatpush.msra.mxu0 0.0
        %678 = vmatpush.msra.mxu0 %v593
        %679 = vmatpush.msra.mxu0 %v590
        %680 = vmatmul.f32.gmra.mxu0 %v596
        %v681 = vpop.f32.mrf.mxu0
        %v682 = vadd.f32 0.0, %v681
        %683 = vdwg.mxu0
        %s684 = scalar_lea.vmem %s375, 12
        %685 = vst.msk [vmem:[%s684] sm:$0xf] %vm618, %v682
        %v686 = vld [vmem:[%s5] sm:$0xff]
        %v687 = vld [vmem:[%s5 + $0x8] sm:$0xff]
        %v688 = vld [vmem:[%s6] sm:$0x3]
        %689 = vmatpush.msra.mxu0 0.0
        %690 = vmatpush.msra.mxu0 0.0
        %691 = vmatpush.msra.mxu0 0.0
        %692 = vmatpush.msra.mxu0 0.0
        %693 = vmatpush.msra.mxu0 0.0
        %694 = vmatpush.msra.mxu0 0.0
        %695 = vmatpush.msra.mxu0 0.0
        %696 = vmatpush.msra.mxu0 0.0
        %697 = vmatpush.msra.mxu0 0.0
        %698 = vmatpush.msra.mxu0 0.0
        %699 = vmatpush.msra.mxu0 0.0
        %700 = vmatpush.msra.mxu0 0.0
        %701 = vmatpush.msra.mxu0 0.0
        %702 = vmatpush.msra.mxu0 0.0
        %703 = vmatpush.msra.mxu0 %v687
        %704 = vmatpush.msra.mxu0 %v686
        %705 = vmatmul.f32.gmra.mxu0 %v396
        %v706 = vpop.f32.mrf.mxu0
        %v707 = vadd.f32 0.0, %v706
        %708 = vmatmul.f32.gmra.mxu0 %v399
        %v709 = vpop.f32.mrf.mxu0
        %v710 = vadd.f32 0.0, %v709
        %711 = vmatmul.f32.gmra.mxu0 %v402
        %v712 = vpop.f32.mrf.mxu0
        %v713 = vadd.f32 0.0, %v712
        %714 = vmatmul.f32.gmra.mxu0 %v405
        %v715 = vpop.f32.mrf.mxu0
        %v716 = vadd.f32 0.0, %v715
        %717 = vmatmul.f32.gmra.mxu0 %v408
        %v718 = vpop.f32.mrf.mxu0
        %v719 = vadd.f32 0.0, %v718
        %720 = vmatmul.f32.gmra.mxu0 %v411
        %v721 = vpop.f32.mrf.mxu0
        %v722 = vadd.f32 0.0, %v721
        %723 = vmatmul.f32.gmra.mxu0 %v414
        %v724 = vpop.f32.mrf.mxu0
        %v725 = vadd.f32 0.0, %v724
        %726 = vmatmul.f32.gmra.mxu0 %v417
        %v727 = vpop.f32.mrf.mxu0
        %v728 = vadd.f32 0.0, %v727
        %729 = vdwg.mxu0
        %v731 = vsel %vm394, %v688, 0
        %733 = vmatpush.msra.mxu0 0.0
        %734 = vmatpush.msra.mxu0 0.0
        %735 = vmatpush.msra.mxu0 0.0
        %736 = vmatpush.msra.mxu0 0.0
        %737 = vmatpush.msra.mxu0 0.0
        %738 = vmatpush.msra.mxu0 0.0
        %739 = vmatpush.msra.mxu0 0.0
        %740 = vmatpush.msra.mxu0 0.0
        %741 = vmatpush.msra.mxu0 0.0
        %742 = vmatpush.msra.mxu0 0.0
        %743 = vmatpush.msra.mxu0 0.0
        %744 = vmatpush.msra.mxu0 0.0
        %745 = vmatpush.msra.mxu0 0.0
        %746 = vmatpush.msra.mxu0 0.0
        %747 = vmatpush.msra.mxu0 %v710
        %748 = vmatpush.msra.mxu0 %v707
        %749 = vmatmul.f32.gmra.mxu0 %v731
        %v750 = vpop.f32.mrf.mxu0
        %v751 = vadd.f32 0.0, %v750
        %752 = vdwg.mxu0
        %vm753 = vcmask 9216
        %754 = vst.msk [vmem:[%s381] sm:$0x3] %vm753, %v751
        %755 = vmatpush.msra.mxu0 0.0
        %756 = vmatpush.msra.mxu0 0.0
        %757 = vmatpush.msra.mxu0 0.0
        %758 = vmatpush.msra.mxu0 0.0
        %759 = vmatpush.msra.mxu0 0.0
        %760 = vmatpush.msra.mxu0 0.0
        %761 = vmatpush.msra.mxu0 0.0
        %762 = vmatpush.msra.mxu0 0.0
        %763 = vmatpush.msra.mxu0 0.0
        %764 = vmatpush.msra.mxu0 0.0
        %765 = vmatpush.msra.mxu0 0.0
        %766 = vmatpush.msra.mxu0 0.0
        %767 = vmatpush.msra.mxu0 0.0
        %768 = vmatpush.msra.mxu0 0.0
        %769 = vmatpush.msra.mxu0 %v716
        %770 = vmatpush.msra.mxu0 %v713
        %771 = vmatmul.f32.gmra.mxu0 %v731
        %v772 = vpop.f32.mrf.mxu0
        %v773 = vadd.f32 0.0, %v772
        %774 = vdwg.mxu0
        %s775 = scalar_lea.vmem %s381, 2
        %776 = vst.msk [vmem:[%s775] sm:$0x3] %vm753, %v773
        %777 = vmatpush.msra.mxu0 0.0
        %778 = vmatpush.msra.mxu0 0.0
        %779 = vmatpush.msra.mxu0 0.0
        %780 = vmatpush.msra.mxu0 0.0
        %781 = vmatpush.msra.mxu0 0.0
        %782 = vmatpush.msra.mxu0 0.0
        %783 = vmatpush.msra.mxu0 0.0
        %784 = vmatpush.msra.mxu0 0.0
        %785 = vmatpush.msra.mxu0 0.0
        %786 = vmatpush.msra.mxu0 0.0
        %787 = vmatpush.msra.mxu0 0.0
        %788 = vmatpush.msra.mxu0 0.0
        %789 = vmatpush.msra.mxu0 0.0
        %790 = vmatpush.msra.mxu0 0.0
        %791 = vmatpush.msra.mxu0 %v722
        %792 = vmatpush.msra.mxu0 %v719
        %793 = vmatmul.f32.gmra.mxu0 %v731
        %v794 = vpop.f32.mrf.mxu0
        %v795 = vadd.f32 0.0, %v794
        %796 = vdwg.mxu0
        %s797 = scalar_lea.vmem %s381, 4
        %798 = vst.msk [vmem:[%s797] sm:$0x3] %vm753, %v795
        %799 = vmatpush.msra.mxu0 0.0
        %800 = vmatpush.msra.mxu0 0.0
        %801 = vmatpush.msra.mxu0 0.0
        %802 = vmatpush.msra.mxu0 0.0
        %803 = vmatpush.msra.mxu0 0.0
        %804 = vmatpush.msra.mxu0 0.0
        %805 = vmatpush.msra.mxu0 0.0
        %806 = vmatpush.msra.mxu0 0.0
        %807 = vmatpush.msra.mxu0 0.0
        %808 = vmatpush.msra.mxu0 0.0
        %809 = vmatpush.msra.mxu0 0.0
        %810 = vmatpush.msra.mxu0 0.0
        %811 = vmatpush.msra.mxu0 0.0
        %812 = vmatpush.msra.mxu0 0.0
        %813 = vmatpush.msra.mxu0 %v728
        %814 = vmatpush.msra.mxu0 %v725
        %815 = vmatmul.f32.gmra.mxu0 %v731
        %v816 = vpop.f32.mrf.mxu0
        %v817 = vadd.f32 0.0, %v816
        %818 = vdwg.mxu0
        %s819 = scalar_lea.vmem %s381, 6
        %820 = vst.msk [vmem:[%s819] sm:$0x3] %vm753, %v817
        %s821 = sand.u32 %s187, 1
        %s822 = scalar_lea.sflag [#allocation4], %s821
        %s823 = sand.u32 %s187, 1
        %s824 = smul.addr %s823, 32
        %s825 = scalar_lea.vmem [#allocation5], %s824
        %s826 = smul.u32 4, %s27
        %p827 = scmp.lt.s32.totalorder %s826, 7
        %s828 = scalar_select %p827, %s826, 7
        %s829 = smul.addr %s828, 4
        %s830 = scalar_lea.vmem %s8, %s829
        %s831 = smul.u32 4, %s27
        %p832 = scmp.lt.s32.totalorder %s831, 7
        %s833 = scalar_select %p832, %s831, 7
        %s834 = smul.addr %s833, 2
        %s835 = scalar_lea.vmem %s9, %s834
        // Predicated region
        $region53: #{tpu_custom_call.1} parent=47 // pred_check
          %p836 = pneg %p197
        $region54: #{tpu_custom_call.1} parent=47 // pred_check_branch
          %838 = sbr.rel (%p836) target = $region56
        $region55: #{tpu_custom_call.1} parent=47 // pred_region
          %s839 = smul.u32 4, %s27
          %841 = vsyncadd %s822, 0
          %s842 = smul.addr %s839, 8
          %s843 = scalar_lea.hbm %s7, %s842
          %s844 = sshll.u32 %s825, 4
          %s845 = int_to_ptr.vmem [resolvable:$true] %s844
          %s846 = sshll.u32 %s843, 4
          %s847 = int_to_ptr.hbm [resolvable:$true] %s846
          %852 = dma.vmem_to_hbm [thread:$0]  %s845, 512, %s847, %s822, 128, 128, 8
        $region56: #{tpu_custom_call.1} parent=47 // pred_fallthru
          _
        // Predicated region
        $region57: #{tpu_custom_call.1} parent=47 // pred_check
          %p853 = pneg %p223
        $region58: #{tpu_custom_call.1} parent=47 // pred_check_branch
          %855 = sbr.rel (%p853) target = $region60
        $region59: #{tpu_custom_call.1} parent=47 // pred_region
          %s856 = smul.u32 4, %s27
        $region60: #{tpu_custom_call.1} parent=47 // pred_fallthru
          _
        // Predicated region
        $region61: #{tpu_custom_call.1} parent=47 // pred_check
          %p857 = pneg %p249
        $region62: #{tpu_custom_call.1} parent=47 // pred_check_branch
          %859 = sbr.rel (%p857) target = $region64
        $region63: #{tpu_custom_call.1} parent=47 // pred_region
          %s860 = smul.u32 4, %s27
        $region64: #{tpu_custom_call.1} parent=47 // pred_fallthru
          _
      $region48: #{tpu_custom_call.1} parent=5 // pred_fallthru
        _
      %p861 = scmp.le.s32.totalorder 2, %s22
      // Predicated region
      $region65: #{tpu_custom_call.1} parent=5 // pred_check
        %p862 = pneg %p861
      $region66: #{tpu_custom_call.1} parent=5 // pred_check_branch
        %864 = sbr.rel (%p862) target = $region68
      $region67: #{tpu_custom_call.1} parent=5 // pred_region
        %s865 = ssub.s32 %s22, 2
        // Predicated region
        $region69: #{tpu_custom_call.1} parent=67 // pred_check
          %p866 = pneg %p203
        $region70: #{tpu_custom_call.1} parent=67 // pred_check_branch
          %868 = sbr.rel (%p866) target = $region72
        $region71: #{tpu_custom_call.1} parent=67 // pred_region
          %s869 = sand.u32 %s188, 1
          %s870 = scalar_lea.sflag [#allocation4], %s869
          %s871 = sand.u32 %s188, 1
          %s872 = smul.addr %s871, 32
          %s873 = scalar_lea.vmem [#allocation5], %s872
          %875 = dma.done %s870, 512
        $region72: #{tpu_custom_call.1} parent=67 // pred_fallthru
          _
        // Predicated region
        $region73: #{tpu_custom_call.1} parent=67 // pred_check
          %p876 = pneg %p229
        $region74: #{tpu_custom_call.1} parent=67 // pred_check_branch
          %878 = sbr.rel (%p876) target = $region76
        $region75: #{tpu_custom_call.1} parent=67 // pred_region
          %s879 = smul.u32 4, %s28
          %p880 = scmp.lt.s32.totalorder %s879, 7
          %s881 = scalar_select %p880, %s879, 7
          %s882 = smul.addr %s881, 4
          %s883 = scalar_lea.vmem %s8, %s882
        $region76: #{tpu_custom_call.1} parent=67 // pred_fallthru
          _
        // Predicated region
        $region77: #{tpu_custom_call.1} parent=67 // pred_check
          %p884 = pneg %p255
        $region78: #{tpu_custom_call.1} parent=67 // pred_check_branch
          %886 = sbr.rel (%p884) target = $region80
        $region79: #{tpu_custom_call.1} parent=67 // pred_region
          %s887 = smul.u32 4, %s28
          %p888 = scmp.lt.s32.totalorder %s887, 7
          %s889 = scalar_select %p888, %s887, 7
          %s890 = smul.addr %s889, 2
          %s891 = scalar_lea.vmem %s9, %s890
        $region80: #{tpu_custom_call.1} parent=67 // pred_fallthru
          _
      $region68: #{tpu_custom_call.1} parent=5 // pred_fallthru
        _
    $region6: #{tpu_custom_call.1} parent=1 // loop_footer
      %s26 = sadd.s32 1, %s22
    $region7: #{tpu_custom_call.1} parent=1 // loop_footer_branch
      %21 = sbr.rel target = $region3
    $region8: #{tpu_custom_call.1} parent=1 // loop_exit
      _
    %892 = vsyncpa [#allocation3], 1
    %s893 = scalar_lea.sflag [#allocation3], 1
    %894 = vsyncpa %s893, 1
    %895 = vsyncpa [#allocation4], 1
    %s896 = scalar_lea.sflag [#allocation4], 1
    %897 = vsyncpa %s896, 1

</llo_original>
